<compile_context>
chip_gen: v5e
topology: v5e:2x2
jax: 0.10.0
libtpu: 0.0.40
codegen_flags: <defaults>
</compile_context>

<pallas_src>
import jax
import jax.numpy as jnp
from jax.experimental import pallas as pl
from jax.experimental.pallas import tpu as pltpu


def critic_kernel(x_ref, w1_ref, w2_ref, p_ref, o_ref):
    # p_ref (f32) rows: 0 -> b1, 1 -> b2, 2 -> w3 (as a row), 3 -> [b3, 0, ...]
    # Layer 1: Linear + ReLU (MXU matmul, f32 accumulate; elementwise in f32).
    h1 = jnp.dot(x_ref[...], w1_ref[...], preferred_element_type=jnp.float32)
    h1 = jnp.maximum(h1 + p_ref[0:1, :], 0.0)

    # Layer 2: Linear + ReLU.
    h2 = jnp.dot(h1.astype(w2_ref.dtype), w2_ref[...],
                 preferred_element_type=jnp.float32)
    h2 = jnp.maximum(h2 + p_ref[1:2, :], 0.0)

    # Layer 3 (out_features == 1): VPU multiply + lane reduction instead of an
    # N=1 MXU matmul.  Result is written with batch on lanes -> dense stores.
    v = jnp.sum(h2 * p_ref[2:3, :], axis=-1)[None, :]      # (1, tb)
    o_ref[...] = (v + p_ref[3:4, 0:1]).astype(o_ref.dtype)


def critic_forward(state, params, *, block_b=1024, matmul_dtype=jnp.float32):
    """state: [B, state_dim].  Returns value: [B, 1] float32.

    block_b:      max batch tile (multiple of 128; 256-multiple preferred for
                  the v6e/v7x MXU).  B <= block_b runs as a single exact tile.
    matmul_dtype: dtype of the streamed state and of w1/w2 fed to the MXU
                  (jnp.bfloat16 recommended on v5e/v6e/v7x; accumulation and
                  all bias/ReLU/head math stay f32).
    """
    w1, b1, w2, b2, w3, b3 = params
    B, state_dim = state.shape
    hidden = w1.shape[1]
    f32 = jnp.float32

    # --- Pad hidden to a multiple of 128 (un-masked lanes / MXU N,K). Exact:
    # padded weight columns/rows and biases are zero.
    hp = max(128, -(-hidden // 128) * 128)
    pad_h = hp - hidden
    w1p = jnp.pad(w1.astype(matmul_dtype), ((0, 0), (0, pad_h)))
    w2p = jnp.pad(w2.astype(matmul_dtype), ((0, pad_h), (0, pad_h)))
    # Packed small params stay f32 (no per-step casts; limits bf16 drift).
    small = jnp.concatenate(
        [jnp.pad(b1.reshape(1, hidden).astype(f32), ((0, 0), (0, pad_h))),
         jnp.pad(b2.reshape(1, hidden).astype(f32), ((0, 0), (0, pad_h))),
         jnp.pad(w3.reshape(1, hidden).astype(f32), ((0, 0), (0, pad_h))),
         jnp.pad(b3.reshape(1, 1).astype(f32), ((0, 0), (0, hp - 1)))],
        axis=0)
    x = state.astype(matmul_dtype)

    # --- Tile selection with an explicit VMEM budget (no wrapper-side pad of
    # x: ragged last tile is handled by Pallas' masked edge blocks).
    xbytes = jnp.dtype(matmul_dtype).itemsize

    def vmem_bytes(tb):
        x_tiles = 2 * tb * state_dim * xbytes          # double-buffered x
        weights = 2 * (state_dim * hp + hp * hp) * xbytes + 2 * 4 * hp * 4
        out_t = 2 * tb * 4                              # (1, tb) f32 out tiles
        interm = 3 * tb * hp * 4                        # h1/h2/temporaries f32
        return x_tiles + weights + out_t + interm

    if B > block_b:
        assert block_b % 128 == 0, "block_b must be a multiple of 128"
        tb = block_b
        while tb > 256 and vmem_bytes(tb) > 40 * 2**20:  # v7x headroom
            tb //= 2
    else:
        tb = B                                           # single exact tile
    num_tiles = pl.cdiv(B, tb)
    vmem_limit = int(min(max(int(1.5 * vmem_bytes(tb)), 32 * 2**20), 64 * 2**20))

    def make_call(single_buffer_weights):
        if single_buffer_weights:
            def const_spec(shape):
                return pl.BlockSpec(shape, lambda i: (0, 0),
                                    pipeline_mode=pl.Buffered(1))
        else:
            def const_spec(shape):
                return pl.BlockSpec(shape, lambda i: (0, 0))
        return pl.pallas_call(
            critic_kernel,
            out_shape=jax.ShapeDtypeStruct((1, B), jnp.float32),
            grid_spec=pltpu.PrefetchScalarGridSpec(
                num_scalar_prefetch=0,
                grid=(num_tiles,),
                in_specs=[
                    # Streamed batch tile (double-buffered by the pipeline).
                    pl.BlockSpec((tb, state_dim), lambda i: (i, 0)),
                    # Resident weights: constant index_map -> DMA'd once.
                    const_spec((state_dim, hp)),
                    const_spec((hp, hp)),
                    const_spec((4, hp)),
                ],
                # Lane-dense output: each grid step writes a (1, tb) row.
                out_specs=pl.BlockSpec((1, tb), lambda i: (0, i)),
            ),
            compiler_params=pltpu.CompilerParams(
                dimension_semantics=("parallel",),   # v7x: tiles over 2 TCs
                vmem_limit_bytes=vmem_limit,
            ),
        )

    try:
        out = make_call(True)(x, w1p, w2p, small)
    except Exception:
        # Fallback if this JAX build rejects single-buffered (Buffered(1))
        # resident inputs; costs only the duplicated weight buffer in VMEM.
        out = make_call(False)(x, w1p, w2p, small)

    # Consumers that accept (B,) / (1, B) can skip this reshape (it is a
    # lanes->sublanes relayout); kept for PyTorch [B, 1] parity.
    return out[0, :].reshape(B, 1)


def init_critic_params(key, state_dim, hidden_dim):
    """PyTorch nn.Linear default init (uniform(-1/sqrt(fan_in), 1/sqrt(fan_in))).
    Weights stored [in, out] so y = x @ W + b == PyTorch's x @ W_pt.T + b."""
    def linear(key, fan_in, fan_out):
        kw, kb = jax.random.split(key)
        bound = 1.0 / jnp.sqrt(fan_in)
        w = jax.random.uniform(kw, (fan_in, fan_out), jnp.float32, -bound, bound)
        b = jax.random.uniform(kb, (1, fan_out), jnp.float32, -bound, bound)
        return w, b

    k1, k2, k3 = jax.random.split(key, 3)
    w1, b1 = linear(k1, state_dim, hidden_dim)
    w2, b2 = linear(k2, hidden_dim, hidden_dim)
    w3, b3 = linear(k3, hidden_dim, 1)
    return (w1, b1, w2, b2, w3, b3)


def critic_reference(state, params):
    w1, b1, w2, b2, w3, b3 = params
    h1 = jnp.maximum(state @ w1 + b1, 0.0)
    h2 = jnp.maximum(h1 @ w2 + b2, 0.0)
    return h2 @ w3 + b3


# TODO(synk): save_checkpoint / load_checkpoint are file I/O and have no
# Pallas equivalent; only the forward pass is implemented here.

if __name__ == "__main__":
    # Small shapes consistent with the module's forward.
    batch, state_dim, hidden_dim = 8, 16, 32

    key = jax.random.PRNGKey(0)
    k_params, k_state, k_big = jax.random.split(key, 3)

    params = init_critic_params(k_params, state_dim, hidden_dim)
    state = jax.random.normal(k_state, (batch, state_dim), jnp.float32)

    # 1) Small-batch, single exact tile, f32.
    value = jax.block_until_ready(critic_forward(state, params))
    ref = critic_reference(state, params)
    assert value.shape == (batch, 1)
    assert jnp.allclose(value, ref, atol=1e-4, rtol=1e-4)

    # 2) Multi-tile path with a ragged (masked) last tile, no wrapper pad, f32.
    big_b = 200
    big_state = jax.random.normal(k_big, (big_b, state_dim), jnp.float32)
    value_big = jax.block_until_ready(
        critic_forward(big_state, params, block_b=128))
    ref_big = critic_reference(big_state, params)
    assert value_big.shape == (big_b, 1)
    assert jnp.allclose(value_big, ref_big, atol=1e-4, rtol=1e-4)

    # 3) bf16 matmul operands with f32 accumulation (intended MXU-friendly
    #    production mode); looser tolerance vs. the f32 reference.
    value_bf16 = jax.block_until_ready(
        critic_forward(big_state, params, block_b=128,
                       matmul_dtype=jnp.bfloat16))
    assert value_bf16.shape == (big_b, 1)
    assert jnp.allclose(value_bf16, ref_big, atol=1e-1, rtol=1e-1)

    print("KERNEL_OK")
</pallas_src>

<mosaic_0001>
module attributes {stable_mosaic.version = 11 : i64} {
  func.func @critic_kernel(%arg0: i32, %arg1: memref<8x16xf32, #tpu.memory_space<vmem>>, %arg2: memref<16x128xf32, #tpu.memory_space<vmem>>, %arg3: memref<128x128xf32, #tpu.memory_space<vmem>>, %arg4: memref<4x128xf32, #tpu.memory_space<vmem>>, %arg5: memref<1x8xf32, #tpu.memory_space<vmem>>) attributes {dimension_semantics = [#tpu.dimension_semantics<parallel>], iteration_bounds = array<i64: 1>, scalar_prefetch = 0 : i64, scratch_operands = 0 : i64, tpu.core_type = #tpu.core_type<tc>, window_params = [{transform_indices = @transform_0, window_bounds = array<i64: 8, 16>}, {pipeline_mode = #tpu.pipeline_mode<synchronous>, transform_indices = @transform_1, window_bounds = array<i64: 16, 128>}, {pipeline_mode = #tpu.pipeline_mode<synchronous>, transform_indices = @transform_2, window_bounds = array<i64: 128, 128>}, {pipeline_mode = #tpu.pipeline_mode<synchronous>, transform_indices = @transform_3, window_bounds = array<i64: 4, 128>}, {transform_indices = @transform_4, window_bounds = array<i64: 1, 8>}]} {
    %c0 = arith.constant 0 : index
    %c0_0 = arith.constant 0 : index
    %0 = vector.load %arg1[%c0, %c0_0] : memref<8x16xf32, #tpu.memory_space<vmem>>, vector<8x16xf32>
    %c0_1 = arith.constant 0 : index
    %c0_2 = arith.constant 0 : index
    %1 = vector.load %arg2[%c0_1, %c0_2] : memref<16x128xf32, #tpu.memory_space<vmem>>, vector<16x128xf32>
    %cst = arith.constant dense<0.000000e+00> : vector<8x128xf32>
    %2 = tpu.matmul %0, %1, %cst {dimension_numbers = #tpu.dot_dimension_numbers<[1], [0], [0], [1], [0, 0, 1, 1], [], []>} : vector<8x16xf32>, vector<16x128xf32>, vector<8x128xf32> -> vector<8x128xf32>
    %c0_3 = arith.constant 0 : index
    %c0_4 = arith.constant 0 : index
    %3 = vector.load %arg4[%c0_3, %c0_4] : memref<4x128xf32, #tpu.memory_space<vmem>>, vector<1x128xf32>
    %4 = vector.broadcast %3 : vector<1x128xf32> to vector<8x128xf32>
    %5 = arith.addf %2, %4 : vector<8x128xf32>
    %cst_5 = arith.constant 0.000000e+00 : f32
    %6 = vector.broadcast %cst_5 : f32 to vector<8x128xf32>
    %7 = arith.maximumf %5, %6 : vector<8x128xf32>
    %c0_6 = arith.constant 0 : index
    %c0_7 = arith.constant 0 : index
    %8 = vector.load %arg3[%c0_6, %c0_7] : memref<128x128xf32, #tpu.memory_space<vmem>>, vector<128x128xf32>
    %cst_8 = arith.constant dense<0.000000e+00> : vector<8x128xf32>
    %9 = tpu.matmul %7, %8, %cst_8 {dimension_numbers = #tpu.dot_dimension_numbers<[1], [0], [0], [1], [0, 0, 1, 1], [], []>} : vector<8x128xf32>, vector<128x128xf32>, vector<8x128xf32> -> vector<8x128xf32>
    %c1 = arith.constant 1 : index
    %c0_9 = arith.constant 0 : index
    %10 = vector.load %arg4[%c1, %c0_9] : memref<4x128xf32, #tpu.memory_space<vmem>>, vector<1x128xf32>
    %11 = vector.broadcast %10 : vector<1x128xf32> to vector<8x128xf32>
    %12 = arith.addf %9, %11 : vector<8x128xf32>
    %cst_10 = arith.constant 0.000000e+00 : f32
    %13 = vector.broadcast %cst_10 : f32 to vector<8x128xf32>
    %14 = arith.maximumf %12, %13 : vector<8x128xf32>
    %c2 = arith.constant 2 : index
    %c0_11 = arith.constant 0 : index
    %15 = vector.load %arg4[%c2, %c0_11] : memref<4x128xf32, #tpu.memory_space<vmem>>, vector<1x128xf32>
    %16 = vector.broadcast %15 : vector<1x128xf32> to vector<8x128xf32>
    %17 = arith.mulf %14, %16 : vector<8x128xf32>
    %cst_12 = arith.constant dense<0.000000e+00> : vector<8xf32>
    %18 = vector.multi_reduction <add>, %17, %cst_12 [1] : vector<8x128xf32> to vector<8xf32>
    %19 = vector.shape_cast %18 : vector<8xf32> to vector<1x8xf32>
    %c3 = arith.constant 3 : index
    %c0_13 = arith.constant 0 : index
    %20 = vector.load %arg4[%c3, %c0_13] : memref<4x128xf32, #tpu.memory_space<vmem>>, vector<1x1xf32>
    %21 = vector.broadcast %20 : vector<1x1xf32> to vector<1x8xf32>
    %22 = arith.addf %19, %21 : vector<1x8xf32>
    %c0_14 = arith.constant 0 : index
    %c0_15 = arith.constant 0 : index
    %23 = vector.load %arg5[%c0_14, %c0_15] : memref<1x8xf32, #tpu.memory_space<vmem>>, vector<1x8xf32>
    tpu.vector_store %arg5[%c0_14, %c0_15], %22 {strides = array<i32>} : memref<1x8xf32, #tpu.memory_space<vmem>>, vector<1x8xf32>,
    return
  }
  func.func @transform_0(%arg0: i32) -> (i32, i32) {
    %c0_i32 = arith.constant 0 : i32
    %c0_i32_0 = arith.constant 0 : i32
    return %arg0, %c0_i32 : i32, i32
  }
  func.func @transform_1(%arg0: i32) -> (i32, i32) {
    %c0_i32 = arith.constant 0 : i32
    %c0_i32_0 = arith.constant 0 : i32
    %c0_i32_1 = arith.constant 0 : i32
    return %c0_i32, %c0_i32_0 : i32, i32
  }
  func.func @transform_2(%arg0: i32) -> (i32, i32) {
    %c0_i32 = arith.constant 0 : i32
    %c0_i32_0 = arith.constant 0 : i32
    %c0_i32_1 = arith.constant 0 : i32
    return %c0_i32, %c0_i32_0 : i32, i32
  }
  func.func @transform_3(%arg0: i32) -> (i32, i32) {
    %c0_i32 = arith.constant 0 : i32
    %c0_i32_0 = arith.constant 0 : i32
    %c0_i32_1 = arith.constant 0 : i32
    return %c0_i32, %c0_i32_0 : i32, i32
  }
  func.func @transform_4(%arg0: i32) -> (i32, i32) {
    %c0_i32 = arith.constant 0 : i32
    %c0_i32_0 = arith.constant 0 : i32
    return %c0_i32, %arg0 : i32, i32
  }
}

module attributes {stable_mosaic.version = 11 : i64} {
  func.func @critic_kernel(%arg0: i32, %arg1: memref<8x16xf32, #tpu.memory_space<vmem>>, %arg2: memref<16x128xf32, #tpu.memory_space<vmem>>, %arg3: memref<128x128xf32, #tpu.memory_space<vmem>>, %arg4: memref<4x128xf32, #tpu.memory_space<vmem>>, %arg5: memref<1x8xf32, #tpu.memory_space<vmem>>) attributes {dimension_semantics = [#tpu.dimension_semantics<parallel>], iteration_bounds = array<i64: 1>, scalar_prefetch = 0 : i64, scratch_operands = 0 : i64, tpu.core_type = #tpu.core_type<tc>, window_params = [{transform_indices = @transform_0, window_bounds = array<i64: 8, 16>}, {pipeline_mode = #tpu.pipeline_mode<synchronous>, transform_indices = @transform_1, window_bounds = array<i64: 16, 128>}, {pipeline_mode = #tpu.pipeline_mode<synchronous>, transform_indices = @transform_2, window_bounds = array<i64: 128, 128>}, {pipeline_mode = #tpu.pipeline_mode<synchronous>, transform_indices = @transform_3, window_bounds = array<i64: 4, 128>}, {transform_indices = @transform_4, window_bounds = array<i64: 1, 8>}]} {
    %c0 = arith.constant 0 : index
    %c0_0 = arith.constant 0 : index
    %0 = vector.load %arg1[%c0, %c0_0] : memref<8x16xf32, #tpu.memory_space<vmem>>, vector<8x16xf32>
    %c0_1 = arith.constant 0 : index
    %c0_2 = arith.constant 0 : index
    %1 = vector.load %arg2[%c0_1, %c0_2] : memref<16x128xf32, #tpu.memory_space<vmem>>, vector<16x128xf32>
    %cst = arith.constant dense<0.000000e+00> : vector<8x128xf32>
    %2 = tpu.matmul %0, %1, %cst {dimension_numbers = #tpu.dot_dimension_numbers<[1], [0], [0], [1], [0, 0, 1, 1], [], []>} : vector<8x16xf32>, vector<16x128xf32>, vector<8x128xf32> -> vector<8x128xf32>
    %c0_3 = arith.constant 0 : index
    %c0_4 = arith.constant 0 : index
    %3 = vector.load %arg4[%c0_3, %c0_4] : memref<4x128xf32, #tpu.memory_space<vmem>>, vector<1x128xf32>
    %4 = vector.broadcast %3 : vector<1x128xf32> to vector<8x128xf32>
    %5 = arith.addf %2, %4 : vector<8x128xf32>
    %cst_5 = arith.constant 0.000000e+00 : f32
    %6 = vector.broadcast %cst_5 : f32 to vector<8x128xf32>
    %7 = arith.maximumf %5, %6 : vector<8x128xf32>
    %c0_6 = arith.constant 0 : index
    %c0_7 = arith.constant 0 : index
    %8 = vector.load %arg3[%c0_6, %c0_7] : memref<128x128xf32, #tpu.memory_space<vmem>>, vector<128x128xf32>
    %cst_8 = arith.constant dense<0.000000e+00> : vector<8x128xf32>
    %9 = tpu.matmul %7, %8, %cst_8 {dimension_numbers = #tpu.dot_dimension_numbers<[1], [0], [0], [1], [0, 0, 1, 1], [], []>} : vector<8x128xf32>, vector<128x128xf32>, vector<8x128xf32> -> vector<8x128xf32>
    %c1 = arith.constant 1 : index
    %c0_9 = arith.constant 0 : index
    %10 = vector.load %arg4[%c1, %c0_9] : memref<4x128xf32, #tpu.memory_space<vmem>>, vector<1x128xf32>
    %11 = vector.broadcast %10 : vector<1x128xf32> to vector<8x128xf32>
    %12 = arith.addf %9, %11 : vector<8x128xf32>
    %cst_10 = arith.constant 0.000000e+00 : f32
    %13 = vector.broadcast %cst_10 : f32 to vector<8x128xf32>
    %14 = arith.maximumf %12, %13 : vector<8x128xf32>
    %c2 = arith.constant 2 : index
    %c0_11 = arith.constant 0 : index
    %15 = vector.load %arg4[%c2, %c0_11] : memref<4x128xf32, #tpu.memory_space<vmem>>, vector<1x128xf32>
    %16 = vector.broadcast %15 : vector<1x128xf32> to vector<8x128xf32>
    %17 = arith.mulf %14, %16 : vector<8x128xf32>
    %cst_12 = arith.constant dense<0.000000e+00> : vector<8xf32>
    %18 = vector.multi_reduction <add>, %17, %cst_12 [1] : vector<8x128xf32> to vector<8xf32>
    %19 = vector.shape_cast %18 : vector<8xf32> to vector<1x8xf32>
    %c3 = arith.constant 3 : index
    %c0_13 = arith.constant 0 : index
    %20 = vector.load %arg4[%c3, %c0_13] : memref<4x128xf32, #tpu.memory_space<vmem>>, vector<1x1xf32>
    %21 = vector.broadcast %20 : vector<1x1xf32> to vector<1x8xf32>
    %22 = arith.addf %19, %21 : vector<1x8xf32>
    %c0_14 = arith.constant 0 : index
    %c0_15 = arith.constant 0 : index
    %23 = vector.load %arg5[%c0_14, %c0_15] : memref<1x8xf32, #tpu.memory_space<vmem>>, vector<1x8xf32>
    tpu.vector_store %arg5[%c0_14, %c0_15], %22 {strides = array<i32>} : memref<1x8xf32, #tpu.memory_space<vmem>>, vector<1x8xf32>,
    return
  }
  func.func @transform_0(%arg0: i32) -> (i32, i32) {
    %c0_i32 = arith.constant 0 : i32
    %c0_i32_0 = arith.constant 0 : i32
    return %arg0, %c0_i32 : i32, i32
  }
  func.func @transform_1(%arg0: i32) -> (i32, i32) {
    %c0_i32 = arith.constant 0 : i32
    %c0_i32_0 = arith.constant 0 : i32
    %c0_i32_1 = arith.constant 0 : i32
    return %c0_i32, %c0_i32_0 : i32, i32
  }
  func.func @transform_2(%arg0: i32) -> (i32, i32) {
    %c0_i32 = arith.constant 0 : i32
    %c0_i32_0 = arith.constant 0 : i32
    %c0_i32_1 = arith.constant 0 : i32
    return %c0_i32, %c0_i32_0 : i32, i32
  }
  func.func @transform_3(%arg0: i32) -> (i32, i32) {
    %c0_i32 = arith.constant 0 : i32
    %c0_i32_0 = arith.constant 0 : i32
    %c0_i32_1 = arith.constant 0 : i32
    return %c0_i32, %c0_i32_0 : i32, i32
  }
  func.func @transform_4(%arg0: i32) -> (i32, i32) {
    %c0_i32 = arith.constant 0 : i32
    %c0_i32_0 = arith.constant 0 : i32
    return %c0_i32, %arg0 : i32, i32
  }
}

</mosaic_0001>

<llo_original>
// kernel: tpu_custom_call.1
$region0: #{tpu_custom_call.1}
  #allocation0 [shape = 'u32[]', space=smem, size = 0x4, offset = 0x4, fixed_abs, tag = 'smem constant byte address 0x4 - core index']
  #allocation1 [shape = 'u32[72,128]{1,0:T(1,128)}', space=vmem, size = 0x9000, scoped, tag = 'internal scratch']
  %s0 = inlined_call_operand.hbm [shape: f32[8,16], index: 0, kind: input, shape index: {}]
  %s1 = inlined_call_operand.hbm [shape: f32[16,128], index: 1, kind: input, shape index: {}]
  %s2 = inlined_call_operand.hbm [shape: f32[128,128], index: 2, kind: input, shape index: {}]
  %s3 = inlined_call_operand.hbm [shape: f32[4,128], index: 3, kind: input, shape index: {}]
  %s4 = inlined_call_operand.hbm [shape: f32[1,8], index: 4, kind: output, shape index: {}]
  %s5 = sld [smem:[#allocation0]]
  $region42: #{tpu_custom_call.1} parent=0
    _
  %s7 = ssub.s32 1, %s5
  %s8 = scalar_select 0, %s7, %s5
  $region1: #{tpu_custom_call.1} parent=0
    #allocation2 [shape = 'u8[4096]{0}', space=vmem, size = 0x1000, scoped, tag = 'input window, operand 0, single buffered']
    #allocation3 [shape = 's32[1]{0}', space=sflag, size = 0x4, scoped, tag = 'scoped memory for tpu_custom_call.1']
    #allocation4 [shape = 's32[1]{0}', space=sflag, size = 0x4, scoped, tag = 'scoped memory for tpu_custom_call.1']
    #allocation5 [shape = 'u8[8192]{0}', space=vmem, size = 0x2000, scoped, tag = 'input window, operand 1, single buffered']
    #allocation6 [shape = 's32[1]{0}', space=sflag, size = 0x4, scoped, tag = 'scoped memory for tpu_custom_call.1']
    #allocation7 [shape = 'u8[65536]{0}', space=vmem, size = 0x10000, scoped, tag = 'input window, operand 2, single buffered']
    #allocation8 [shape = 'u8[2048]{0}', space=vmem, size = 0x800, scoped, tag = 'input window, operand 3, single buffered']
    #allocation9 [shape = 's32[1]{0}', space=sflag, size = 0x4, scoped, tag = 'scoped memory for tpu_custom_call.1']
    #allocation10 [shape = 'u8[512]{0}', space=vmem, size = 0x400, scoped, tag = 'output window, operand 0, single buffered']
    %9 = vsyncpa [#allocation3], 0
    %10 = vsyncpa [#allocation6], 0
    %11 = vsyncpa [#allocation9], 0
    %12 = vsyncpa [#allocation4], 0
    // Predicated region
    $region2: #{tpu_custom_call.1} parent=1 // pred_check
      _
    $region3: #{tpu_custom_call.1} parent=1 // pred_check_branch
      %14 = sbr.rel (0) target = $region5
    $region4: #{tpu_custom_call.1} parent=1 // pred_region
      %16 = vsyncadd [#allocation3], 0
      %s18 = sshll.u32 %s0, 4
      %s19 = int_to_ptr.hbm [resolvable:$true] %s18
      %s20 = sshll.u32 [#allocation2], 4
      %s21 = int_to_ptr.vmem [resolvable:$true] %s20
      %23 = dma.hbm_to_vmem [thread:$0]  %s19, 128, %s21, [#allocation3]
    $region5: #{tpu_custom_call.1} parent=1 // pred_fallthru
      _
    // Predicated region
    $region6: #{tpu_custom_call.1} parent=1 // pred_check
      _
    $region7: #{tpu_custom_call.1} parent=1 // pred_check_branch
      %25 = sbr.rel (0) target = $region9
    $region8: #{tpu_custom_call.1} parent=1 // pred_region
      %27 = vsyncadd [#allocation6], 0
      %s28 = sshll.u32 %s1, 4
      %s29 = int_to_ptr.hbm [resolvable:$true] %s28
      %s30 = sshll.u32 [#allocation5], 4
      %s31 = int_to_ptr.vmem [resolvable:$true] %s30
      %36 = dma.hbm_to_vmem [thread:$0]  %s29, 256, %s31, [#allocation6], 128, 128, 8
    $region9: #{tpu_custom_call.1} parent=1 // pred_fallthru
      _
    // Predicated region
    $region10: #{tpu_custom_call.1} parent=1 // pred_check
      _
    $region11: #{tpu_custom_call.1} parent=1 // pred_check_branch
      %38 = sbr.rel (0) target = $region13
    $region12: #{tpu_custom_call.1} parent=1 // pred_region
      %40 = vsyncadd [#allocation6], 0
      %s41 = sshll.u32 %s2, 4
      %s42 = int_to_ptr.hbm [resolvable:$true] %s41
      %s43 = sshll.u32 [#allocation7], 4
      %s44 = int_to_ptr.vmem [resolvable:$true] %s43
      %49 = dma.hbm_to_vmem [thread:$0]  %s42, 2048, %s44, [#allocation6], 128, 128, 8
    $region13: #{tpu_custom_call.1} parent=1 // pred_fallthru
      _
    // Predicated region
    $region14: #{tpu_custom_call.1} parent=1 // pred_check
      _
    $region15: #{tpu_custom_call.1} parent=1 // pred_check_branch
      %51 = sbr.rel (0) target = $region17
    $region16: #{tpu_custom_call.1} parent=1 // pred_region
      %53 = vsyncadd [#allocation9], 0
      %s55 = sshll.u32 %s3, 4
      %s56 = int_to_ptr.hbm [resolvable:$true] %s55
      %s57 = sshll.u32 [#allocation8], 4
      %s58 = int_to_ptr.vmem [resolvable:$true] %s57
      %60 = dma.hbm_to_vmem [thread:$0]  %s56, 64, %s58, [#allocation9]
    $region17: #{tpu_custom_call.1} parent=1 // pred_fallthru
      _
    // Predicated region
    $region18: #{tpu_custom_call.1} parent=1 // pred_check
      _
    $region19: #{tpu_custom_call.1} parent=1 // pred_check_branch
      %62 = sbr.rel (0) target = $region21
    $region20: #{tpu_custom_call.1} parent=1 // pred_region
      %64 = dma.done [#allocation3], 128
    $region21: #{tpu_custom_call.1} parent=1 // pred_fallthru
      _
    // Predicated region
    $region22: #{tpu_custom_call.1} parent=1 // pred_check
      _
    $region23: #{tpu_custom_call.1} parent=1 // pred_check_branch
      %66 = sbr.rel (0) target = $region25
    $region24: #{tpu_custom_call.1} parent=1 // pred_region
      %68 = dma.done [#allocation6], 256
    $region25: #{tpu_custom_call.1} parent=1 // pred_fallthru
      _
    // Predicated region
    $region26: #{tpu_custom_call.1} parent=1 // pred_check
      _
    $region27: #{tpu_custom_call.1} parent=1 // pred_check_branch
      %70 = sbr.rel (0) target = $region29
    $region28: #{tpu_custom_call.1} parent=1 // pred_region
      %72 = dma.done [#allocation6], 2048
    $region29: #{tpu_custom_call.1} parent=1 // pred_fallthru
      _
    // Predicated region
    $region30: #{tpu_custom_call.1} parent=1 // pred_check
      _
    $region31: #{tpu_custom_call.1} parent=1 // pred_check_branch
      %74 = sbr.rel (0) target = $region33
    $region32: #{tpu_custom_call.1} parent=1 // pred_region
      %76 = dma.done [#allocation9], 64
    $region33: #{tpu_custom_call.1} parent=1 // pred_fallthru
      _
    %v77 = vld [vmem:[#allocation2] sm:$0xff]
    %v78 = vld [vmem:[#allocation5] sm:$0xff]
    %v79 = vld [vmem:[#allocation5 + $0x8] sm:$0xff]
    %v80 = vld [vmem:[#allocation8] sm:$0x1]
    %v81 = vperm.slane %v80, 0
    %vm82 = vcmask 130048
    %v84 = vsel %vm82, %v77, 0
    %86 = vmatpush.msra.mxu0 0.0
    %87 = vmatpush.msra.mxu0 0.0
    %88 = vmatpush.msra.mxu0 0.0
    %89 = vmatpush.msra.mxu0 0.0
    %90 = vmatpush.msra.mxu0 0.0
    %91 = vmatpush.msra.mxu0 0.0
    %92 = vmatpush.msra.mxu0 0.0
    %93 = vmatpush.msra.mxu0 0.0
    %94 = vmatpush.msra.mxu0 0.0
    %95 = vmatpush.msra.mxu0 0.0
    %96 = vmatpush.msra.mxu0 0.0
    %97 = vmatpush.msra.mxu0 0.0
    %98 = vmatpush.msra.mxu0 0.0
    %99 = vmatpush.msra.mxu0 0.0
    %100 = vmatpush.msra.mxu0 %v79
    %101 = vmatpush.msra.mxu0 %v78
    %102 = vmatmul.f32.gmra.mxu0 %v84
    %v103 = vpop.f32.mrf.mxu0
    %v104 = vadd.f32 %v81, %v103
    %105 = vdwg.mxu0
    %v106 = vmax.f32 %v104, 0.0
    %v107 = vld [vmem:[#allocation7] sm:$0xff]
    %v108 = vld [vmem:[#allocation7 + $0x8] sm:$0xff]
    %v109 = vld [vmem:[#allocation7 + $0x10] sm:$0xff]
    %v110 = vld [vmem:[#allocation7 + $0x18] sm:$0xff]
    %v111 = vld [vmem:[#allocation7 + $0x20] sm:$0xff]
    %v112 = vld [vmem:[#allocation7 + $0x28] sm:$0xff]
    %v113 = vld [vmem:[#allocation7 + $0x30] sm:$0xff]
    %v114 = vld [vmem:[#allocation7 + $0x38] sm:$0xff]
    %v115 = vld [vmem:[#allocation7 + $0x40] sm:$0xff]
    %v116 = vld [vmem:[#allocation7 + $0x48] sm:$0xff]
    %v117 = vld [vmem:[#allocation7 + $0x50] sm:$0xff]
    %v118 = vld [vmem:[#allocation7 + $0x58] sm:$0xff]
    %v119 = vld [vmem:[#allocation7 + $0x60] sm:$0xff]
    %v120 = vld [vmem:[#allocation7 + $0x68] sm:$0xff]
    %v121 = vld [vmem:[#allocation7 + $0x70] sm:$0xff]
    %v122 = vld [vmem:[#allocation7 + $0x78] sm:$0xff]
    %v123 = vld [vmem:[#allocation8 + $0x1] sm:$0x1]
    %v124 = vperm.slane %v123, 0
    %125 = vmatpush.msra.mxu0 %v122
    %126 = vmatpush.msra.mxu0 %v121
    %127 = vmatpush.msra.mxu0 %v120
    %128 = vmatpush.msra.mxu0 %v119
    %129 = vmatpush.msra.mxu0 %v118
    %130 = vmatpush.msra.mxu0 %v117
    %131 = vmatpush.msra.mxu0 %v116
    %132 = vmatpush.msra.mxu0 %v115
    %133 = vmatpush.msra.mxu0 %v114
    %134 = vmatpush.msra.mxu0 %v113
    %135 = vmatpush.msra.mxu0 %v112
    %136 = vmatpush.msra.mxu0 %v111
    %137 = vmatpush.msra.mxu0 %v110
    %138 = vmatpush.msra.mxu0 %v109
    %139 = vmatpush.msra.mxu0 %v108
    %140 = vmatpush.msra.mxu0 %v107
    %141 = vmatmul.f32.gmra.mxu0 %v106
    %v142 = vpop.f32.mrf.mxu0
    %v143 = vadd.f32 %v124, %v142
    %144 = vdwg.mxu0
    %v145 = vmax.f32 %v143, 0.0
    %v146 = vld [vmem:[#allocation8 + $0x2] sm:$0x1]
    %v147 = vperm.slane %v146, 0
    %v148 = vmul.f32 %v145, %v147
    %149 = vadd.xlane.f32.xlu0 %v148
    %v150 = vpop.xlane.xlu0 %149
    %v151 = vld [vmem:[#allocation8 + $0x3] sm:$0x1]
    %153 = vset.pattern.permute.xlu0 0
    %154 = vperm.xlu0 %153, %v151
    %v155 = vpop.permute.xlu0 %154
    %v156 = vperm.slane %v155, 0
    %v158 = vadd.f32 %v150, %v156
    %160 = vset.pattern.permute.xlu0 0
    %161 = vperm.xlu0 %160, %v158
    %v162 = vpop.permute.xlu0 %161
    %v163 = vlaneseq
    %v164 = vand.u32 %v163, 127
    %v165 = vperm.slane %v162, %v164
    %vm167 = vcmask 57344
    %168 = vst.msk [vmem:[#allocation10] sm:$0x1] %vm167, %v165
    // Predicated region
    $region34: #{tpu_custom_call.1} parent=1 // pred_check
      _
    $region35: #{tpu_custom_call.1} parent=1 // pred_check_branch
      %170 = sbr.rel (0) target = $region37
    $region36: #{tpu_custom_call.1} parent=1 // pred_region
      %172 = vsyncadd [#allocation4], 0
      %s174 = sshll.u32 [#allocation10], 4
      %s175 = int_to_ptr.vmem [resolvable:$true] %s174
      %s176 = sshll.u32 %s4, 4
      %s177 = int_to_ptr.hbm [resolvable:$true] %s176
      %179 = dma.vmem_to_hbm [thread:$0]  %s175, 16, %s177, [#allocation4]
    $region37: #{tpu_custom_call.1} parent=1 // pred_fallthru
      _
    // Predicated region
    $region38: #{tpu_custom_call.1} parent=1 // pred_check
      _
    $region39: #{tpu_custom_call.1} parent=1 // pred_check_branch
      %181 = sbr.rel (0) target = $region41
    $region40: #{tpu_custom_call.1} parent=1 // pred_region
      %183 = dma.done [#allocation4], 16
    $region41: #{tpu_custom_call.1} parent=1 // pred_fallthru
      _
    %184 = vsyncpa [#allocation3], 1
    %185 = vsyncpa [#allocation6], 1
    %186 = vsyncpa [#allocation9], 1
    %187 = vsyncpa [#allocation4], 1

// kernel: tpu_custom_call.1
$region0: #{tpu_custom_call.1}
  #allocation0 [shape = 'u32[]', space=smem, size = 0x4, offset = 0x4, fixed_abs, tag = 'smem constant byte address 0x4 - core index']
  #allocation1 [shape = 'u32[72,128]{1,0:T(1,128)}', space=vmem, size = 0x9000, scoped, tag = 'internal scratch']
  %s0 = inlined_call_operand.hbm [shape: f32[8,16], index: 0, kind: input, shape index: {}]
  %s1 = inlined_call_operand.hbm [shape: f32[16,128], index: 1, kind: input, shape index: {}]
  %s2 = inlined_call_operand.hbm [shape: f32[128,128], index: 2, kind: input, shape index: {}]
  %s3 = inlined_call_operand.hbm [shape: f32[4,128], index: 3, kind: input, shape index: {}]
  %s4 = inlined_call_operand.hbm [shape: f32[1,8], index: 4, kind: output, shape index: {}]
  %s5 = sld [smem:[#allocation0]]
  $region42: #{tpu_custom_call.1} parent=0
    _
  %s7 = ssub.s32 1, %s5
  %s8 = scalar_select 0, %s7, %s5
  $region1: #{tpu_custom_call.1} parent=0
    #allocation2 [shape = 'u8[4096]{0}', space=vmem, size = 0x1000, scoped, tag = 'input window, operand 0, single buffered']
    #allocation3 [shape = 's32[1]{0}', space=sflag, size = 0x4, scoped, tag = 'scoped memory for tpu_custom_call.1']
    #allocation4 [shape = 's32[1]{0}', space=sflag, size = 0x4, scoped, tag = 'scoped memory for tpu_custom_call.1']
    #allocation5 [shape = 'u8[8192]{0}', space=vmem, size = 0x2000, scoped, tag = 'input window, operand 1, single buffered']
    #allocation6 [shape = 's32[1]{0}', space=sflag, size = 0x4, scoped, tag = 'scoped memory for tpu_custom_call.1']
    #allocation7 [shape = 'u8[65536]{0}', space=vmem, size = 0x10000, scoped, tag = 'input window, operand 2, single buffered']
    #allocation8 [shape = 'u8[2048]{0}', space=vmem, size = 0x800, scoped, tag = 'input window, operand 3, single buffered']
    #allocation9 [shape = 's32[1]{0}', space=sflag, size = 0x4, scoped, tag = 'scoped memory for tpu_custom_call.1']
    #allocation10 [shape = 'u8[512]{0}', space=vmem, size = 0x400, scoped, tag = 'output window, operand 0, single buffered']
    %9 = vsyncpa [#allocation3], 0
    %10 = vsyncpa [#allocation6], 0
    %11 = vsyncpa [#allocation9], 0
    %12 = vsyncpa [#allocation4], 0
    // Predicated region
    $region2: #{tpu_custom_call.1} parent=1 // pred_check
      _
    $region3: #{tpu_custom_call.1} parent=1 // pred_check_branch
      %14 = sbr.rel (0) target = $region5
    $region4: #{tpu_custom_call.1} parent=1 // pred_region
      %16 = vsyncadd [#allocation3], 0
      %s18 = sshll.u32 %s0, 4
      %s19 = int_to_ptr.hbm [resolvable:$true] %s18
      %s20 = sshll.u32 [#allocation2], 4
      %s21 = int_to_ptr.vmem [resolvable:$true] %s20
      %23 = dma.hbm_to_vmem [thread:$0]  %s19, 128, %s21, [#allocation3]
    $region5: #{tpu_custom_call.1} parent=1 // pred_fallthru
      _
    // Predicated region
    $region6: #{tpu_custom_call.1} parent=1 // pred_check
      _
    $region7: #{tpu_custom_call.1} parent=1 // pred_check_branch
      %25 = sbr.rel (0) target = $region9
    $region8: #{tpu_custom_call.1} parent=1 // pred_region
      %27 = vsyncadd [#allocation6], 0
      %s28 = sshll.u32 %s1, 4
      %s29 = int_to_ptr.hbm [resolvable:$true] %s28
      %s30 = sshll.u32 [#allocation5], 4
      %s31 = int_to_ptr.vmem [resolvable:$true] %s30
      %36 = dma.hbm_to_vmem [thread:$0]  %s29, 256, %s31, [#allocation6], 128, 128, 8
    $region9: #{tpu_custom_call.1} parent=1 // pred_fallthru
      _
    // Predicated region
    $region10: #{tpu_custom_call.1} parent=1 // pred_check
      _
    $region11: #{tpu_custom_call.1} parent=1 // pred_check_branch
      %38 = sbr.rel (0) target = $region13
    $region12: #{tpu_custom_call.1} parent=1 // pred_region
      %40 = vsyncadd [#allocation6], 0
      %s41 = sshll.u32 %s2, 4
      %s42 = int_to_ptr.hbm [resolvable:$true] %s41
      %s43 = sshll.u32 [#allocation7], 4
      %s44 = int_to_ptr.vmem [resolvable:$true] %s43
      %49 = dma.hbm_to_vmem [thread:$0]  %s42, 2048, %s44, [#allocation6], 128, 128, 8
    $region13: #{tpu_custom_call.1} parent=1 // pred_fallthru
      _
    // Predicated region
    $region14: #{tpu_custom_call.1} parent=1 // pred_check
      _
    $region15: #{tpu_custom_call.1} parent=1 // pred_check_branch
      %51 = sbr.rel (0) target = $region17
    $region16: #{tpu_custom_call.1} parent=1 // pred_region
      %53 = vsyncadd [#allocation9], 0
      %s55 = sshll.u32 %s3, 4
      %s56 = int_to_ptr.hbm [resolvable:$true] %s55
      %s57 = sshll.u32 [#allocation8], 4
      %s58 = int_to_ptr.vmem [resolvable:$true] %s57
      %60 = dma.hbm_to_vmem [thread:$0]  %s56, 64, %s58, [#allocation9]
    $region17: #{tpu_custom_call.1} parent=1 // pred_fallthru
      _
    // Predicated region
    $region18: #{tpu_custom_call.1} parent=1 // pred_check
      _
    $region19: #{tpu_custom_call.1} parent=1 // pred_check_branch
      %62 = sbr.rel (0) target = $region21
    $region20: #{tpu_custom_call.1} parent=1 // pred_region
      %64 = dma.done [#allocation3], 128
    $region21: #{tpu_custom_call.1} parent=1 // pred_fallthru
      _
    // Predicated region
    $region22: #{tpu_custom_call.1} parent=1 // pred_check
      _
    $region23: #{tpu_custom_call.1} parent=1 // pred_check_branch
      %66 = sbr.rel (0) target = $region25
    $region24: #{tpu_custom_call.1} parent=1 // pred_region
      %68 = dma.done [#allocation6], 256
    $region25: #{tpu_custom_call.1} parent=1 // pred_fallthru
      _
    // Predicated region
    $region26: #{tpu_custom_call.1} parent=1 // pred_check
      _
    $region27: #{tpu_custom_call.1} parent=1 // pred_check_branch
      %70 = sbr.rel (0) target = $region29
    $region28: #{tpu_custom_call.1} parent=1 // pred_region
      %72 = dma.done [#allocation6], 2048
    $region29: #{tpu_custom_call.1} parent=1 // pred_fallthru
      _
    // Predicated region
    $region30: #{tpu_custom_call.1} parent=1 // pred_check
      _
    $region31: #{tpu_custom_call.1} parent=1 // pred_check_branch
      %74 = sbr.rel (0) target = $region33
    $region32: #{tpu_custom_call.1} parent=1 // pred_region
      %76 = dma.done [#allocation9], 64
    $region33: #{tpu_custom_call.1} parent=1 // pred_fallthru
      _
    %v77 = vld [vmem:[#allocation2] sm:$0xff]
    %v78 = vld [vmem:[#allocation5] sm:$0xff]
    %v79 = vld [vmem:[#allocation5 + $0x8] sm:$0xff]
    %v80 = vld [vmem:[#allocation8] sm:$0x1]
    %v81 = vperm.slane %v80, 0
    %vm82 = vcmask 130048
    %v84 = vsel %vm82, %v77, 0
    %86 = vmatpush.msra.mxu0 0.0
    %87 = vmatpush.msra.mxu0 0.0
    %88 = vmatpush.msra.mxu0 0.0
    %89 = vmatpush.msra.mxu0 0.0
    %90 = vmatpush.msra.mxu0 0.0
    %91 = vmatpush.msra.mxu0 0.0
    %92 = vmatpush.msra.mxu0 0.0
    %93 = vmatpush.msra.mxu0 0.0
    %94 = vmatpush.msra.mxu0 0.0
    %95 = vmatpush.msra.mxu0 0.0
    %96 = vmatpush.msra.mxu0 0.0
    %97 = vmatpush.msra.mxu0 0.0
    %98 = vmatpush.msra.mxu0 0.0
    %99 = vmatpush.msra.mxu0 0.0
    %100 = vmatpush.msra.mxu0 %v79
    %101 = vmatpush.msra.mxu0 %v78
    %102 = vmatmul.f32.gmra.mxu0 %v84
    %v103 = vpop.f32.mrf.mxu0
    %v104 = vadd.f32 %v81, %v103
    %105 = vdwg.mxu0
    %v106 = vmax.f32 %v104, 0.0
    %v107 = vld [vmem:[#allocation7] sm:$0xff]
    %v108 = vld [vmem:[#allocation7 + $0x8] sm:$0xff]
    %v109 = vld [vmem:[#allocation7 + $0x10] sm:$0xff]
    %v110 = vld [vmem:[#allocation7 + $0x18] sm:$0xff]
    %v111 = vld [vmem:[#allocation7 + $0x20] sm:$0xff]
    %v112 = vld [vmem:[#allocation7 + $0x28] sm:$0xff]
    %v113 = vld [vmem:[#allocation7 + $0x30] sm:$0xff]
    %v114 = vld [vmem:[#allocation7 + $0x38] sm:$0xff]
    %v115 = vld [vmem:[#allocation7 + $0x40] sm:$0xff]
    %v116 = vld [vmem:[#allocation7 + $0x48] sm:$0xff]
    %v117 = vld [vmem:[#allocation7 + $0x50] sm:$0xff]
    %v118 = vld [vmem:[#allocation7 + $0x58] sm:$0xff]
    %v119 = vld [vmem:[#allocation7 + $0x60] sm:$0xff]
    %v120 = vld [vmem:[#allocation7 + $0x68] sm:$0xff]
    %v121 = vld [vmem:[#allocation7 + $0x70] sm:$0xff]
    %v122 = vld [vmem:[#allocation7 + $0x78] sm:$0xff]
    %v123 = vld [vmem:[#allocation8 + $0x1] sm:$0x1]
    %v124 = vperm.slane %v123, 0
    %125 = vmatpush.msra.mxu0 %v122
    %126 = vmatpush.msra.mxu0 %v121
    %127 = vmatpush.msra.mxu0 %v120
    %128 = vmatpush.msra.mxu0 %v119
    %129 = vmatpush.msra.mxu0 %v118
    %130 = vmatpush.msra.mxu0 %v117
    %131 = vmatpush.msra.mxu0 %v116
    %132 = vmatpush.msra.mxu0 %v115
    %133 = vmatpush.msra.mxu0 %v114
    %134 = vmatpush.msra.mxu0 %v113
    %135 = vmatpush.msra.mxu0 %v112
    %136 = vmatpush.msra.mxu0 %v111
    %137 = vmatpush.msra.mxu0 %v110
    %138 = vmatpush.msra.mxu0 %v109
    %139 = vmatpush.msra.mxu0 %v108
    %140 = vmatpush.msra.mxu0 %v107
    %141 = vmatmul.f32.gmra.mxu0 %v106
    %v142 = vpop.f32.mrf.mxu0
    %v143 = vadd.f32 %v124, %v142
    %144 = vdwg.mxu0
    %v145 = vmax.f32 %v143, 0.0
    %v146 = vld [vmem:[#allocation8 + $0x2] sm:$0x1]
    %v147 = vperm.slane %v146, 0
    %v148 = vmul.f32 %v145, %v147
    %149 = vadd.xlane.f32.xlu0 %v148
    %v150 = vpop.xlane.xlu0 %149
    %v151 = vld [vmem:[#allocation8 + $0x3] sm:$0x1]
    %153 = vset.pattern.permute.xlu0 0
    %154 = vperm.xlu0 %153, %v151
    %v155 = vpop.permute.xlu0 %154
    %v156 = vperm.slane %v155, 0
    %v158 = vadd.f32 %v150, %v156
    %160 = vset.pattern.permute.xlu0 0
    %161 = vperm.xlu0 %160, %v158
    %v162 = vpop.permute.xlu0 %161
    %v163 = vlaneseq
    %v164 = vand.u32 %v163, 127
    %v165 = vperm.slane %v162, %v164
    %vm167 = vcmask 57344
    %168 = vst.msk [vmem:[#allocation10] sm:$0x1] %vm167, %v165
    // Predicated region
    $region34: #{tpu_custom_call.1} parent=1 // pred_check
      _
    $region35: #{tpu_custom_call.1} parent=1 // pred_check_branch
      %170 = sbr.rel (0) target = $region37
    $region36: #{tpu_custom_call.1} parent=1 // pred_region
      %172 = vsyncadd [#allocation4], 0
      %s174 = sshll.u32 [#allocation10], 4
      %s175 = int_to_ptr.vmem [resolvable:$true] %s174
      %s176 = sshll.u32 %s4, 4
      %s177 = int_to_ptr.hbm [resolvable:$true] %s176
      %179 = dma.vmem_to_hbm [thread:$0]  %s175, 16, %s177, [#allocation4]
    $region37: #{tpu_custom_call.1} parent=1 // pred_fallthru
      _
    // Predicated region
    $region38: #{tpu_custom_call.1} parent=1 // pred_check
      _
    $region39: #{tpu_custom_call.1} parent=1 // pred_check_branch
      %181 = sbr.rel (0) target = $region41
    $region40: #{tpu_custom_call.1} parent=1 // pred_region
      %183 = dma.done [#allocation4], 16
    $region41: #{tpu_custom_call.1} parent=1 // pred_fallthru
      _
    %184 = vsyncpa [#allocation3], 1
    %185 = vsyncpa [#allocation6], 1
    %186 = vsyncpa [#allocation9], 1
    %187 = vsyncpa [#allocation4], 1

</llo_original>
